<compile_context>
chip_gen: v5e
topology: v5e:2x2
jax: 0.10.0
libtpu: 0.0.40
codegen_flags: <defaults>
</compile_context>

<pallas_src>
import functools

import jax
import jax.numpy as jnp
from jax.experimental import pallas as pl
from jax.experimental.pallas import tpu as pltpu


def _tcn_fused_kernel(*refs, cfgs, k, seg_len):
    """Fused TCN forward for one lane-folded block of batch elements.

    refs = (x_ref, t_ref, b_ref, <per-layer weight refs...>, o_ref)
      x_ref : (1, Cin0, lanes) f32   -- n_fold batch elements side by side on lanes
      t_ref : (1, lanes) int32       -- within-segment time index (lane % seg_len)
      b_ref : (rows, 1)  f32         -- all conv biases, packed along sublanes
      per layer: w1 (k*Cout, Cin) bf16, w2 (k*Cout, Cout) bf16,
                 [wd (Cout, Cin) bf16]            # only if Cin != Cout
      o_ref : (1, CoutLast, lanes) f32
    cfgs: static tuple of (c_in, c_out, dilation, has_downsample,
                           bias_off1, bias_off2, bias_offd) per layer.
    """
    x_ref, t_ref, b_ref = refs[0], refs[1], refs[2]
    o_ref = refs[-1]
    w_refs = refs[3:-1]

    t_in_seg = t_ref[...]                                # (1, lanes) int32

    def causal_tap(y, s):
        # y: (c, lanes) f32.  Per-segment causal shift (chomp + zero left-pad):
        #   out[:, g] = y[:, g - s] if (g % seg_len) >= s else 0
        if s == 0:
            return y
        if s >= seg_len:
            return jnp.zeros_like(y)
        rolled = pltpu.roll(y, shift=s, axis=1)          # XLU, off the VALU path
        return jnp.where(t_in_seg >= s, rolled, jnp.zeros_like(rolled))

    def causal_conv(a, w_ref, b_off, c_out, d):
        # a: (c_in, lanes) bf16.  One MXU matmul for all k taps (shift commutes
        # with the channel-mixing matmul), then shift each slice into place.
        y = jnp.dot(w_ref[...], a, preferred_element_type=jnp.float32)
        acc = y[(k - 1) * c_out:, :]                     # tap j = k-1 has shift 0
        for j in range(k - 1):
            acc = acc + causal_tap(y[j * c_out:(j + 1) * c_out, :],
                                   (k - 1 - j) * d)
        return acc + b_ref[b_off:b_off + c_out, :]       # bias bcast over lanes

    x_f32 = x_ref[0]                                     # (Cin0, lanes) f32
    x = x_f32.astype(jnp.bfloat16)
    y_out = x_f32
    wi = 0
    for (_c_in, c_out, d, has_ds, off1, off2, offd) in cfgs:
        w1, w2 = w_refs[wi], w_refs[wi + 1]
        wi += 2
        # conv1 -> chomp -> ReLU     (dropout1 == identity, eval)
        h = jnp.maximum(causal_conv(x, w1, off1, c_out, d), 0.0).astype(jnp.bfloat16)
        # conv2 -> chomp -> ReLU     (dropout2 == identity, eval)
        out = jnp.maximum(causal_conv(h, w2, off2, c_out, d), 0.0)
        # residual branch (1x1 conv when channel counts differ) + final ReLU
        if has_ds:
            wd = w_refs[wi]
            wi += 1
            res = jnp.dot(wd[...], x, preferred_element_type=jnp.float32) \
                + b_ref[offd:offd + c_out, :]
        else:
            res = x.astype(jnp.float32)
        y_out = jnp.maximum(out + res, 0.0)
        x = y_out.astype(jnp.bfloat16)                   # bf16 activations between layers

    o_ref[0] = y_out.astype(o_ref.dtype)


def _pick_vmem_limit():
    """Generation-aware VMEM budget (None -> keep the compiler default)."""
    try:
        kind = jax.devices()[0].device_kind.lower()
    except Exception:
        return None
    if "v5" in kind or "v6" in kind:
        return 96 * 1024 * 1024      # 128 MiB physical VMEM: pipeline headroom
    if "v7" in kind:
        return 48 * 1024 * 1024      # 64 MiB physical on v7x: stay conservative
    return None


def temporal_conv_net(x_ncl, params, kernel_size=2):
    """PyTorch-equivalent forward.  x_ncl: (B, C_in, L) -> (B, C_out, L)."""
    x = jnp.asarray(x_ncl, jnp.float32)
    B, c0, L = x.shape
    k = kernel_size

    # ---- fold batch elements onto the lane axis (lane-dense blocks) --------
    n_fold = max(1, min(B, -(-128 // L)))     # ceil(128/L) elements per grid step
    G = -(-B // n_fold)                       # grid steps ("parallel" axis)
    B_pad = G * n_fold
    Lt = n_fold * L
    lanes = -(-Lt // 128) * 128               # pad lane axis to a 128 multiple
    xp = x if B_pad == B else jnp.pad(x, ((0, B_pad - B), (0, 0), (0, 0)))
    if n_fold > 1:
        xp = xp.reshape(G, n_fold, c0, L).transpose(0, 2, 1, 3).reshape(G, c0, Lt)
    else:
        xp = xp.reshape(G, c0, Lt)
    if lanes != Lt:
        xp = jnp.pad(xp, ((0, 0), (0, 0), (0, lanes - Lt)))
    t_idx = (jnp.arange(lanes, dtype=jnp.int32) % L).reshape(1, lanes)

    # ---- pack weights (tap-stacked bf16) and biases (one f32 slab) ---------
    cfgs, w_args, bias_slabs = [], [], []
    row = 0

    def pack_bias(b):
        nonlocal row
        c = b.shape[0]
        off = row
        rpad = (-c) % 8                       # keep every bias 8-sublane aligned
        bias_slabs.append(jnp.pad(b.astype(jnp.float32).reshape(c, 1),
                                  ((0, rpad), (0, 0))))
        row += c + rpad
        return off

    def stack_taps(w_oik):                    # (Cout, Cin, k) -> (k*Cout, Cin) bf16
        co, ci, kk = w_oik.shape
        return jnp.transpose(w_oik, (2, 0, 1)).reshape(kk * co, ci).astype(jnp.bfloat16)

    c_last = c0
    for i, p in enumerate(params):
        c_out, c_in, kk = p["w1"].shape
        assert kk == k
        has_ds = "wd" in p
        off1, off2 = pack_bias(p["b1"]), pack_bias(p["b2"])
        offd = pack_bias(p["bd"]) if has_ds else -1
        w_args += [stack_taps(p["w1"]), stack_taps(p["w2"])]
        if has_ds:
            w_args.append(p["wd"].astype(jnp.bfloat16))
        cfgs.append((c_in, c_out, 2 ** i, has_ds, off1, off2, offd))
        c_last = c_out
    b_all = jnp.concatenate(bias_slabs, axis=0)

    # ---- BlockSpecs / pallas_call -------------------------------------------
    # TODO(synk): for very long L / very wide configs add a T-tile grid axis
    # with a receptive-field halo and single-buffered (pl.Buffered(1)) weight
    # specs to bound VMEM on v7x (64 MiB); unnecessary at TCN-typical sizes.
    in_specs = [pl.BlockSpec((1, c0, lanes), lambda g: (g, 0, 0)),
                pl.BlockSpec((1, lanes), lambda g: (0, 0)),
                pl.BlockSpec(b_all.shape, lambda g: (0, 0))]
    in_specs += [pl.BlockSpec(w.shape, lambda g: (0, 0)) for w in w_args]

    kernel = functools.partial(_tcn_fused_kernel, cfgs=tuple(cfgs), k=k, seg_len=L)
    vmem_limit = _pick_vmem_limit()
    extra = {"vmem_limit_bytes": vmem_limit} if vmem_limit else {}
    out = pl.pallas_call(
        kernel,
        out_shape=jax.ShapeDtypeStruct((G, c_last, lanes), jnp.float32),
        grid_spec=pltpu.PrefetchScalarGridSpec(
            num_scalar_prefetch=0,
            grid=(G,),
            in_specs=in_specs,
            out_specs=pl.BlockSpec((1, c_last, lanes), lambda g: (g, 0, 0)),
        ),
        compiler_params=pltpu.CompilerParams(
            dimension_semantics=("parallel",),        # shard blocks over v7x's 2 TCs
            **extra,
        ),
    )(xp, t_idx, b_all, *w_args)

    # ---- unfold back to (B, C_out, L) ----------------------------------------
    out = out[:, :, :Lt]
    if n_fold > 1:
        out = out.reshape(G, c_last, n_fold, L).transpose(0, 2, 1, 3)
    out = out.reshape(B_pad, c_last, L)
    return out[:B]


def init_tcn_params(key, num_inputs, num_channels, kernel_size=2):
    """Params matching TemporalBlock.init_weights() (weight_norm: w == v at init).

    Stored in PyTorch layout / f32; the wrapper stacks + casts to bf16 for MXU.
    """
    params = []
    in_c = num_inputs
    for out_c in num_channels:
        key, k1, k2, k3, k4, k5, k6 = jax.random.split(key, 7)
        w1 = 0.01 * jax.random.normal(k1, (out_c, in_c, kernel_size), jnp.float32)
        w2 = 0.01 * jax.random.normal(k2, (out_c, out_c, kernel_size), jnp.float32)
        bound1 = 1.0 / (in_c * kernel_size) ** 0.5
        bound2 = 1.0 / (out_c * kernel_size) ** 0.5
        b1 = jax.random.uniform(k3, (out_c,), jnp.float32, -bound1, bound1)
        b2 = jax.random.uniform(k4, (out_c,), jnp.float32, -bound2, bound2)
        p = dict(w1=w1, b1=b1, w2=w2, b2=b2)
        if in_c != out_c:  # downsample 1x1 conv only when channel counts differ
            p["wd"] = 0.01 * jax.random.normal(k5, (out_c, in_c), jnp.float32)
            boundd = 1.0 / in_c ** 0.5
            p["bd"] = jax.random.uniform(k6, (out_c,), jnp.float32, -boundd, boundd)
        params.append(p)
        in_c = out_c
    return params


def _ref_tcn(x_ncl, params, kernel_size=2):
    """Pure-JAX f32 reference of the same forward (validation only)."""
    x = jnp.asarray(x_ncl, jnp.float32)
    k = kernel_size
    L = x.shape[2]
    for i, p in enumerate(params):
        d = 2 ** i
        pad = (k - 1) * d

        def conv(a, w, b):
            ap = jnp.pad(a, ((0, 0), (0, 0), (pad, 0)))
            y = jnp.zeros((a.shape[0], w.shape[0], L), jnp.float32)
            for j in range(k):
                y = y + jnp.einsum("oc,bct->bot", w[:, :, j],
                                   ap[:, :, j * d:j * d + L])
            return y + b[None, :, None]

        h = jax.nn.relu(conv(x, p["w1"], p["b1"]))
        out = jax.nn.relu(conv(h, p["w2"], p["b2"]))
        if "wd" in p:
            res = jnp.einsum("oc,bct->bot", p["wd"], x) + p["bd"][None, :, None]
        else:
            res = x
        x = jax.nn.relu(out + res)
    return x


if __name__ == "__main__":
    key = jax.random.PRNGKey(0)
    kx, kp = jax.random.split(key)

    B, num_inputs, L = 2, 4, 16
    num_channels = [8, 8, 16]   # block 0: 4->8 (ds), 1: 8->8, 2: 8->16 (ds)
    kernel_size = 2

    x = jax.random.normal(kx, (B, num_inputs, L), jnp.float32)
    params = init_tcn_params(kp, num_inputs, num_channels, kernel_size)

    out = jax.block_until_ready(temporal_conv_net(x, params, kernel_size))
    assert out.shape == (B, num_channels[-1], L), out.shape
    assert bool(jnp.all(jnp.isfinite(out)))

    ref = _ref_tcn(x, params, kernel_size)
    err = float(jnp.max(jnp.abs(out - ref)))
    assert err < 2e-2, err   # bf16 weights/activations vs f32 reference
    print("KERNEL_OK")
</pallas_src>

<mosaic_0001>
module attributes {stable_mosaic.version = 11 : i64} {
  func.func @_tcn_fused_kernel(%arg0: i32, %arg1: memref<1x4x128xf32, #tpu.memory_space<vmem>>, %arg2: memref<1x128xi32, #tpu.memory_space<vmem>>, %arg3: memref<88x1xf32, #tpu.memory_space<vmem>>, %arg4: memref<16x4xbf16, #tpu.memory_space<vmem>>, %arg5: memref<16x8xbf16, #tpu.memory_space<vmem>>, %arg6: memref<8x4xbf16, #tpu.memory_space<vmem>>, %arg7: memref<16x8xbf16, #tpu.memory_space<vmem>>, %arg8: memref<16x8xbf16, #tpu.memory_space<vmem>>, %arg9: memref<32x8xbf16, #tpu.memory_space<vmem>>, %arg10: memref<32x16xbf16, #tpu.memory_space<vmem>>, %arg11: memref<16x8xbf16, #tpu.memory_space<vmem>>, %arg12: memref<1x16x128xf32, #tpu.memory_space<vmem>>) attributes {dimension_semantics = [#tpu.dimension_semantics<parallel>], iteration_bounds = array<i64: 1>, scalar_prefetch = 0 : i64, scratch_operands = 0 : i64, tpu.core_type = #tpu.core_type<tc>, window_params = [{transform_indices = @transform_0, window_bounds = array<i64: 1, 4, 128>}, {pipeline_mode = #tpu.pipeline_mode<synchronous>, transform_indices = @transform_1, window_bounds = array<i64: 1, 128>}, {pipeline_mode = #tpu.pipeline_mode<synchronous>, transform_indices = @transform_2, window_bounds = array<i64: 88, 1>}, {pipeline_mode = #tpu.pipeline_mode<synchronous>, transform_indices = @transform_3, window_bounds = array<i64: 16, 4>}, {pipeline_mode = #tpu.pipeline_mode<synchronous>, transform_indices = @transform_4, window_bounds = array<i64: 16, 8>}, {pipeline_mode = #tpu.pipeline_mode<synchronous>, transform_indices = @transform_5, window_bounds = array<i64: 8, 4>}, {pipeline_mode = #tpu.pipeline_mode<synchronous>, transform_indices = @transform_6, window_bounds = array<i64: 16, 8>}, {pipeline_mode = #tpu.pipeline_mode<synchronous>, transform_indices = @transform_7, window_bounds = array<i64: 16, 8>}, {pipeline_mode = #tpu.pipeline_mode<synchronous>, transform_indices = @transform_8, window_bounds = array<i64: 32, 8>}, {pipeline_mode = #tpu.pipeline_mode<synchronous>, transform_indices = @transform_9, window_bounds = array<i64: 32, 16>}, {pipeline_mode = #tpu.pipeline_mode<synchronous>, transform_indices = @transform_10, window_bounds = array<i64: 16, 8>}, {transform_indices = @transform_11, window_bounds = array<i64: 1, 16, 128>}]} {
    %c0 = arith.constant 0 : index
    %c0_0 = arith.constant 0 : index
    %0 = vector.load %arg2[%c0, %c0_0] : memref<1x128xi32, #tpu.memory_space<vmem>>, vector<1x128xi32>
    %c0_1 = arith.constant 0 : index
    %c0_2 = arith.constant 0 : index
    %c0_3 = arith.constant 0 : index
    %1 = vector.load %arg1[%c0_1, %c0_2, %c0_3] : memref<1x4x128xf32, #tpu.memory_space<vmem>>, vector<1x4x128xf32>
    %2 = vector.shape_cast %1 : vector<1x4x128xf32> to vector<4x128xf32>
    %3 = arith.truncf %2 : vector<4x128xf32> to vector<4x128xbf16>
    %c0_4 = arith.constant 0 : index
    %c0_5 = arith.constant 0 : index
    %4 = vector.load %arg4[%c0_4, %c0_5] : memref<16x4xbf16, #tpu.memory_space<vmem>>, vector<16x4xbf16>
    %cst = arith.constant dense<0.000000e+00> : vector<16x128xf32>
    %5 = tpu.matmul %4, %3, %cst {dimension_numbers = #tpu.dot_dimension_numbers<[1], [0], [0], [1], [0, 0, 1, 1], [], []>} : vector<16x4xbf16>, vector<4x128xbf16>, vector<16x128xf32> -> vector<16x128xf32>
    %6 = vector.extract_strided_slice %5 {offsets = [8, 0], sizes = [8, 128], strides = [1, 1]} : vector<16x128xf32> to vector<8x128xf32>
    %7 = vector.extract_strided_slice %5 {offsets = [0, 0], sizes = [8, 128], strides = [1, 1]} : vector<16x128xf32> to vector<8x128xf32>
    %c1_i32 = arith.constant 1 : i32
    %8 = tpu.dynamic_rotate %7 by %c1_i32 dim 1 : vector<8x128xf32>, i32 -> vector<8x128xf32>
    %c1_i32_6 = arith.constant 1 : i32
    %9 = vector.broadcast %c1_i32_6 : i32 to vector<1x128xi32>
    %10 = arith.cmpi sge, %0, %9 : vector<1x128xi32>
    %cst_7 = arith.constant 0.000000e+00 : f32
    %11 = vector.broadcast %cst_7 : f32 to vector<8x128xf32>
    %12 = vector.shape_cast %10 : vector<1x128xi1> to vector<1x128xi1>
    %13 = vector.broadcast %12 : vector<1x128xi1> to vector<8x128xi1>
    %14 = arith.select %13, %8, %11 : vector<8x128xi1>, vector<8x128xf32>
    %15 = arith.addf %6, %14 : vector<8x128xf32>
    %c0_8 = arith.constant 0 : index
    %c0_9 = arith.constant 0 : index
    %16 = vector.load %arg3[%c0_8, %c0_9] : memref<88x1xf32, #tpu.memory_space<vmem>>, vector<8x1xf32>
    %17 = vector.broadcast %16 : vector<8x1xf32> to vector<8x128xf32>
    %18 = arith.addf %15, %17 : vector<8x128xf32>
    %cst_10 = arith.constant 0.000000e+00 : f32
    %19 = vector.broadcast %cst_10 : f32 to vector<8x128xf32>
    %20 = arith.maximumf %18, %19 : vector<8x128xf32>
    %21 = arith.truncf %20 : vector<8x128xf32> to vector<8x128xbf16>
    %c0_11 = arith.constant 0 : index
    %c0_12 = arith.constant 0 : index
    %22 = vector.load %arg5[%c0_11, %c0_12] : memref<16x8xbf16, #tpu.memory_space<vmem>>, vector<16x8xbf16>
    %cst_13 = arith.constant dense<0.000000e+00> : vector<16x128xf32>
    %23 = tpu.matmul %22, %21, %cst_13 {dimension_numbers = #tpu.dot_dimension_numbers<[1], [0], [0], [1], [0, 0, 1, 1], [], []>} : vector<16x8xbf16>, vector<8x128xbf16>, vector<16x128xf32> -> vector<16x128xf32>
    %24 = vector.extract_strided_slice %23 {offsets = [8, 0], sizes = [8, 128], strides = [1, 1]} : vector<16x128xf32> to vector<8x128xf32>
    %25 = vector.extract_strided_slice %23 {offsets = [0, 0], sizes = [8, 128], strides = [1, 1]} : vector<16x128xf32> to vector<8x128xf32>
    %c1_i32_14 = arith.constant 1 : i32
    %26 = tpu.dynamic_rotate %25 by %c1_i32_14 dim 1 : vector<8x128xf32>, i32 -> vector<8x128xf32>
    %c1_i32_15 = arith.constant 1 : i32
    %27 = vector.broadcast %c1_i32_15 : i32 to vector<1x128xi32>
    %28 = arith.cmpi sge, %0, %27 : vector<1x128xi32>
    %cst_16 = arith.constant 0.000000e+00 : f32
    %29 = vector.broadcast %cst_16 : f32 to vector<8x128xf32>
    %30 = vector.shape_cast %28 : vector<1x128xi1> to vector<1x128xi1>
    %31 = vector.broadcast %30 : vector<1x128xi1> to vector<8x128xi1>
    %32 = arith.select %31, %26, %29 : vector<8x128xi1>, vector<8x128xf32>
    %33 = arith.addf %24, %32 : vector<8x128xf32>
    %c8 = arith.constant 8 : index
    %c0_17 = arith.constant 0 : index
    %34 = vector.load %arg3[%c8, %c0_17] : memref<88x1xf32, #tpu.memory_space<vmem>>, vector<8x1xf32>
    %35 = vector.broadcast %34 : vector<8x1xf32> to vector<8x128xf32>
    %36 = arith.addf %33, %35 : vector<8x128xf32>
    %cst_18 = arith.constant 0.000000e+00 : f32
    %37 = vector.broadcast %cst_18 : f32 to vector<8x128xf32>
    %38 = arith.maximumf %36, %37 : vector<8x128xf32>
    %c0_19 = arith.constant 0 : index
    %c0_20 = arith.constant 0 : index
    %39 = vector.load %arg6[%c0_19, %c0_20] : memref<8x4xbf16, #tpu.memory_space<vmem>>, vector<8x4xbf16>
    %cst_21 = arith.constant dense<0.000000e+00> : vector<8x128xf32>
    %40 = tpu.matmul %39, %3, %cst_21 {dimension_numbers = #tpu.dot_dimension_numbers<[1], [0], [0], [1], [0, 0, 1, 1], [], []>} : vector<8x4xbf16>, vector<4x128xbf16>, vector<8x128xf32> -> vector<8x128xf32>
    %c16 = arith.constant 16 : index
    %c0_22 = arith.constant 0 : index
    %41 = vector.load %arg3[%c16, %c0_22] : memref<88x1xf32, #tpu.memory_space<vmem>>, vector<8x1xf32>
    %42 = vector.broadcast %41 : vector<8x1xf32> to vector<8x128xf32>
    %43 = arith.addf %40, %42 : vector<8x128xf32>
    %44 = arith.addf %38, %43 : vector<8x128xf32>
    %cst_23 = arith.constant 0.000000e+00 : f32
    %45 = vector.broadcast %cst_23 : f32 to vector<8x128xf32>
    %46 = arith.maximumf %44, %45 : vector<8x128xf32>
    %47 = arith.truncf %46 : vector<8x128xf32> to vector<8x128xbf16>
    %c0_24 = arith.constant 0 : index
    %c0_25 = arith.constant 0 : index
    %48 = vector.load %arg7[%c0_24, %c0_25] : memref<16x8xbf16, #tpu.memory_space<vmem>>, vector<16x8xbf16>
    %cst_26 = arith.constant dense<0.000000e+00> : vector<16x128xf32>
    %49 = tpu.matmul %48, %47, %cst_26 {dimension_numbers = #tpu.dot_dimension_numbers<[1], [0], [0], [1], [0, 0, 1, 1], [], []>} : vector<16x8xbf16>, vector<8x128xbf16>, vector<16x128xf32> -> vector<16x128xf32>
    %50 = vector.extract_strided_slice %49 {offsets = [8, 0], sizes = [8, 128], strides = [1, 1]} : vector<16x128xf32> to vector<8x128xf32>
    %51 = vector.extract_strided_slice %49 {offsets = [0, 0], sizes = [8, 128], strides = [1, 1]} : vector<16x128xf32> to vector<8x128xf32>
    %c2_i32 = arith.constant 2 : i32
    %52 = tpu.dynamic_rotate %51 by %c2_i32 dim 1 : vector<8x128xf32>, i32 -> vector<8x128xf32>
    %c2_i32_27 = arith.constant 2 : i32
    %53 = vector.broadcast %c2_i32_27 : i32 to vector<1x128xi32>
    %54 = arith.cmpi sge, %0, %53 : vector<1x128xi32>
    %cst_28 = arith.constant 0.000000e+00 : f32
    %55 = vector.broadcast %cst_28 : f32 to vector<8x128xf32>
    %56 = vector.shape_cast %54 : vector<1x128xi1> to vector<1x128xi1>
    %57 = vector.broadcast %56 : vector<1x128xi1> to vector<8x128xi1>
    %58 = arith.select %57, %52, %55 : vector<8x128xi1>, vector<8x128xf32>
    %59 = arith.addf %50, %58 : vector<8x128xf32>
    %c24 = arith.constant 24 : index
    %c0_29 = arith.constant 0 : index
    %60 = vector.load %arg3[%c24, %c0_29] : memref<88x1xf32, #tpu.memory_space<vmem>>, vector<8x1xf32>
    %61 = vector.broadcast %60 : vector<8x1xf32> to vector<8x128xf32>
    %62 = arith.addf %59, %61 : vector<8x128xf32>
    %cst_30 = arith.constant 0.000000e+00 : f32
    %63 = vector.broadcast %cst_30 : f32 to vector<8x128xf32>
    %64 = arith.maximumf %62, %63 : vector<8x128xf32>
    %65 = arith.truncf %64 : vector<8x128xf32> to vector<8x128xbf16>
    %c0_31 = arith.constant 0 : index
    %c0_32 = arith.constant 0 : index
    %66 = vector.load %arg8[%c0_31, %c0_32] : memref<16x8xbf16, #tpu.memory_space<vmem>>, vector<16x8xbf16>
    %cst_33 = arith.constant dense<0.000000e+00> : vector<16x128xf32>
    %67 = tpu.matmul %66, %65, %cst_33 {dimension_numbers = #tpu.dot_dimension_numbers<[1], [0], [0], [1], [0, 0, 1, 1], [], []>} : vector<16x8xbf16>, vector<8x128xbf16>, vector<16x128xf32> -> vector<16x128xf32>
    %68 = vector.extract_strided_slice %67 {offsets = [8, 0], sizes = [8, 128], strides = [1, 1]} : vector<16x128xf32> to vector<8x128xf32>
    %69 = vector.extract_strided_slice %67 {offsets = [0, 0], sizes = [8, 128], strides = [1, 1]} : vector<16x128xf32> to vector<8x128xf32>
    %c2_i32_34 = arith.constant 2 : i32
    %70 = tpu.dynamic_rotate %69 by %c2_i32_34 dim 1 : vector<8x128xf32>, i32 -> vector<8x128xf32>
    %c2_i32_35 = arith.constant 2 : i32
    %71 = vector.broadcast %c2_i32_35 : i32 to vector<1x128xi32>
    %72 = arith.cmpi sge, %0, %71 : vector<1x128xi32>
    %cst_36 = arith.constant 0.000000e+00 : f32
    %73 = vector.broadcast %cst_36 : f32 to vector<8x128xf32>
    %74 = vector.shape_cast %72 : vector<1x128xi1> to vector<1x128xi1>
    %75 = vector.broadcast %74 : vector<1x128xi1> to vector<8x128xi1>
    %76 = arith.select %75, %70, %73 : vector<8x128xi1>, vector<8x128xf32>
    %77 = arith.addf %68, %76 : vector<8x128xf32>
    %c32 = arith.constant 32 : index
    %c0_37 = arith.constant 0 : index
    %78 = vector.load %arg3[%c32, %c0_37] : memref<88x1xf32, #tpu.memory_space<vmem>>, vector<8x1xf32>
    %79 = vector.broadcast %78 : vector<8x1xf32> to vector<8x128xf32>
    %80 = arith.addf %77, %79 : vector<8x128xf32>
    %cst_38 = arith.constant 0.000000e+00 : f32
    %81 = vector.broadcast %cst_38 : f32 to vector<8x128xf32>
    %82 = arith.maximumf %80, %81 : vector<8x128xf32>
    %83 = arith.extf %47 : vector<8x128xbf16> to vector<8x128xf32>
    %84 = arith.addf %82, %83 : vector<8x128xf32>
    %cst_39 = arith.constant 0.000000e+00 : f32
    %85 = vector.broadcast %cst_39 : f32 to vector<8x128xf32>
    %86 = arith.maximumf %84, %85 : vector<8x128xf32>
    %87 = arith.truncf %86 : vector<8x128xf32> to vector<8x128xbf16>
    %c0_40 = arith.constant 0 : index
    %c0_41 = arith.constant 0 : index
    %88 = vector.load %arg9[%c0_40, %c0_41] : memref<32x8xbf16, #tpu.memory_space<vmem>>, vector<32x8xbf16>
    %cst_42 = arith.constant dense<0.000000e+00> : vector<32x128xf32>
    %89 = tpu.matmul %88, %87, %cst_42 {dimension_numbers = #tpu.dot_dimension_numbers<[1], [0], [0], [1], [0, 0, 1, 1], [], []>} : vector<32x8xbf16>, vector<8x128xbf16>, vector<32x128xf32> -> vector<32x128xf32>
    %90 = vector.extract_strided_slice %89 {offsets = [16, 0], sizes = [16, 128], strides = [1, 1]} : vector<32x128xf32> to vector<16x128xf32>
    %91 = vector.extract_strided_slice %89 {offsets = [0, 0], sizes = [16, 128], strides = [1, 1]} : vector<32x128xf32> to vector<16x128xf32>
    %c4_i32 = arith.constant 4 : i32
    %92 = tpu.dynamic_rotate %91 by %c4_i32 dim 1 : vector<16x128xf32>, i32 -> vector<16x128xf32>
    %c4_i32_43 = arith.constant 4 : i32
    %93 = vector.broadcast %c4_i32_43 : i32 to vector<1x128xi32>
    %94 = arith.cmpi sge, %0, %93 : vector<1x128xi32>
    %cst_44 = arith.constant 0.000000e+00 : f32
    %95 = vector.broadcast %cst_44 : f32 to vector<16x128xf32>
    %96 = vector.shape_cast %94 : vector<1x128xi1> to vector<1x128xi1>
    %97 = vector.broadcast %96 : vector<1x128xi1> to vector<16x128xi1>
    %98 = arith.select %97, %92, %95 : vector<16x128xi1>, vector<16x128xf32>
    %99 = arith.addf %90, %98 : vector<16x128xf32>
    %c40 = arith.constant 40 : index
    %c0_45 = arith.constant 0 : index
    %100 = vector.load %arg3[%c40, %c0_45] : memref<88x1xf32, #tpu.memory_space<vmem>>, vector<16x1xf32>
    %101 = vector.broadcast %100 : vector<16x1xf32> to vector<16x128xf32>
    %102 = arith.addf %99, %101 : vector<16x128xf32>
    %cst_46 = arith.constant 0.000000e+00 : f32
    %103 = vector.broadcast %cst_46 : f32 to vector<16x128xf32>
    %104 = arith.maximumf %102, %103 : vector<16x128xf32>
    %105 = arith.truncf %104 : vector<16x128xf32> to vector<16x128xbf16>
    %c0_47 = arith.constant 0 : index
    %c0_48 = arith.constant 0 : index
    %106 = vector.load %arg10[%c0_47, %c0_48] : memref<32x16xbf16, #tpu.memory_space<vmem>>, vector<32x16xbf16>
    %cst_49 = arith.constant dense<0.000000e+00> : vector<32x128xf32>
    %107 = tpu.matmul %106, %105, %cst_49 {dimension_numbers = #tpu.dot_dimension_numbers<[1], [0], [0], [1], [0, 0, 1, 1], [], []>} : vector<32x16xbf16>, vector<16x128xbf16>, vector<32x128xf32> -> vector<32x128xf32>
    %108 = vector.extract_strided_slice %107 {offsets = [16, 0], sizes = [16, 128], strides = [1, 1]} : vector<32x128xf32> to vector<16x128xf32>
    %109 = vector.extract_strided_slice %107 {offsets = [0, 0], sizes = [16, 128], strides = [1, 1]} : vector<32x128xf32> to vector<16x128xf32>
    %c4_i32_50 = arith.constant 4 : i32
    %110 = tpu.dynamic_rotate %109 by %c4_i32_50 dim 1 : vector<16x128xf32>, i32 -> vector<16x128xf32>
    %c4_i32_51 = arith.constant 4 : i32
    %111 = vector.broadcast %c4_i32_51 : i32 to vector<1x128xi32>
    %112 = arith.cmpi sge, %0, %111 : vector<1x128xi32>
    %cst_52 = arith.constant 0.000000e+00 : f32
    %113 = vector.broadcast %cst_52 : f32 to vector<16x128xf32>
    %114 = vector.shape_cast %112 : vector<1x128xi1> to vector<1x128xi1>
    %115 = vector.broadcast %114 : vector<1x128xi1> to vector<16x128xi1>
    %116 = arith.select %115, %110, %113 : vector<16x128xi1>, vector<16x128xf32>
    %117 = arith.addf %108, %116 : vector<16x128xf32>
    %c56 = arith.constant 56 : index
    %c0_53 = arith.constant 0 : index
    %118 = vector.load %arg3[%c56, %c0_53] : memref<88x1xf32, #tpu.memory_space<vmem>>, vector<16x1xf32>
    %119 = vector.broadcast %118 : vector<16x1xf32> to vector<16x128xf32>
    %120 = arith.addf %117, %119 : vector<16x128xf32>
    %cst_54 = arith.constant 0.000000e+00 : f32
    %121 = vector.broadcast %cst_54 : f32 to vector<16x128xf32>
    %122 = arith.maximumf %120, %121 : vector<16x128xf32>
    %c0_55 = arith.constant 0 : index
    %c0_56 = arith.constant 0 : index
    %123 = vector.load %arg11[%c0_55, %c0_56] : memref<16x8xbf16, #tpu.memory_space<vmem>>, vector<16x8xbf16>
    %cst_57 = arith.constant dense<0.000000e+00> : vector<16x128xf32>
    %124 = tpu.matmul %123, %87, %cst_57 {dimension_numbers = #tpu.dot_dimension_numbers<[1], [0], [0], [1], [0, 0, 1, 1], [], []>} : vector<16x8xbf16>, vector<8x128xbf16>, vector<16x128xf32> -> vector<16x128xf32>
    %c72 = arith.constant 72 : index
    %c0_58 = arith.constant 0 : index
    %125 = vector.load %arg3[%c72, %c0_58] : memref<88x1xf32, #tpu.memory_space<vmem>>, vector<16x1xf32>
    %126 = vector.broadcast %125 : vector<16x1xf32> to vector<16x128xf32>
    %127 = arith.addf %124, %126 : vector<16x128xf32>
    %128 = arith.addf %122, %127 : vector<16x128xf32>
    %cst_59 = arith.constant 0.000000e+00 : f32
    %129 = vector.broadcast %cst_59 : f32 to vector<16x128xf32>
    %130 = arith.maximumf %128, %129 : vector<16x128xf32>
    %c0_60 = arith.constant 0 : index
    %c0_61 = arith.constant 0 : index
    %c0_62 = arith.constant 0 : index
    %131 = vector.load %arg12[%c0_60, %c0_61, %c0_62] : memref<1x16x128xf32, #tpu.memory_space<vmem>>, vector<1x16x128xf32>
    %132 = vector.shape_cast %131 : vector<1x16x128xf32> to vector<16x128xf32>
    %133 = vector.shape_cast %130 : vector<16x128xf32> to vector<1x16x128xf32>
    tpu.vector_store %arg12[%c0_60, %c0_61, %c0_62], %133 {strides = array<i32>} : memref<1x16x128xf32, #tpu.memory_space<vmem>>, vector<1x16x128xf32>,
    return
  }
  func.func @transform_0(%arg0: i32) -> (i32, i32, i32) {
    %c0_i32 = arith.constant 0 : i32
    %c0_i32_0 = arith.constant 0 : i32
    %c0_i32_1 = arith.constant 0 : i32
    return %arg0, %c0_i32, %c0_i32_0 : i32, i32, i32
  }
  func.func @transform_1(%arg0: i32) -> (i32, i32) {
    %c0_i32 = arith.constant 0 : i32
    %c0_i32_0 = arith.constant 0 : i32
    %c0_i32_1 = arith.constant 0 : i32
    return %c0_i32, %c0_i32_0 : i32, i32
  }
  func.func @transform_2(%arg0: i32) -> (i32, i32) {
    %c0_i32 = arith.constant 0 : i32
    %c0_i32_0 = arith.constant 0 : i32
    %c0_i32_1 = arith.constant 0 : i32
    return %c0_i32, %c0_i32_0 : i32, i32
  }
  func.func @transform_3(%arg0: i32) -> (i32, i32) {
    %c0_i32 = arith.constant 0 : i32
    %c0_i32_0 = arith.constant 0 : i32
    %c0_i32_1 = arith.constant 0 : i32
    return %c0_i32, %c0_i32_0 : i32, i32
  }
  func.func @transform_4(%arg0: i32) -> (i32, i32) {
    %c0_i32 = arith.constant 0 : i32
    %c0_i32_0 = arith.constant 0 : i32
    %c0_i32_1 = arith.constant 0 : i32
    return %c0_i32, %c0_i32_0 : i32, i32
  }
  func.func @transform_5(%arg0: i32) -> (i32, i32) {
    %c0_i32 = arith.constant 0 : i32
    %c0_i32_0 = arith.constant 0 : i32
    %c0_i32_1 = arith.constant 0 : i32
    return %c0_i32, %c0_i32_0 : i32, i32
  }
  func.func @transform_6(%arg0: i32) -> (i32, i32) {
    %c0_i32 = arith.constant 0 : i32
    %c0_i32_0 = arith.constant 0 : i32
    %c0_i32_1 = arith.constant 0 : i32
    return %c0_i32, %c0_i32_0 : i32, i32
  }
  func.func @transform_7(%arg0: i32) -> (i32, i32) {
    %c0_i32 = arith.constant 0 : i32
    %c0_i32_0 = arith.constant 0 : i32
    %c0_i32_1 = arith.constant 0 : i32
    return %c0_i32, %c0_i32_0 : i32, i32
  }
  func.func @transform_8(%arg0: i32) -> (i32, i32) {
    %c0_i32 = arith.constant 0 : i32
    %c0_i32_0 = arith.constant 0 : i32
    %c0_i32_1 = arith.constant 0 : i32
    return %c0_i32, %c0_i32_0 : i32, i32
  }
  func.func @transform_9(%arg0: i32) -> (i32, i32) {
    %c0_i32 = arith.constant 0 : i32
    %c0_i32_0 = arith.constant 0 : i32
    %c0_i32_1 = arith.constant 0 : i32
    return %c0_i32, %c0_i32_0 : i32, i32
  }
  func.func @transform_10(%arg0: i32) -> (i32, i32) {
    %c0_i32 = arith.constant 0 : i32
    %c0_i32_0 = arith.constant 0 : i32
    %c0_i32_1 = arith.constant 0 : i32
    return %c0_i32, %c0_i32_0 : i32, i32
  }
  func.func @transform_11(%arg0: i32) -> (i32, i32, i32) {
    %c0_i32 = arith.constant 0 : i32
    %c0_i32_0 = arith.constant 0 : i32
    %c0_i32_1 = arith.constant 0 : i32
    return %arg0, %c0_i32, %c0_i32_0 : i32, i32, i32
  }
}

</mosaic_0001>

<llo_original>
// kernel: tpu_custom_call.1
$region0: #{tpu_custom_call.1}
  #allocation0 [shape = 'u32[]', space=smem, size = 0x4, offset = 0x4, fixed_abs, tag = 'smem constant byte address 0x4 - core index']
  #allocation1 [shape = 'u32[72,128]{1,0:T(1,128)}', space=vmem, size = 0x9000, scoped, tag = 'internal scratch']
  %s0 = inlined_call_operand.vmem [shape: f32[1,4,128], index: 0, kind: input, shape index: {}]
  %s1 = inlined_call_operand.vmem [shape: s32[1,128], index: 1, kind: input, shape index: {}]
  %s2 = inlined_call_operand.vmem [shape: f32[88,1], index: 2, kind: input, shape index: {}]
  %s3 = inlined_call_operand.vmem [shape: bf16[16,4], index: 3, kind: input, shape index: {}]
  %s4 = inlined_call_operand.vmem [shape: bf16[16,8], index: 4, kind: input, shape index: {}]
  %s5 = inlined_call_operand.vmem [shape: bf16[8,4], index: 5, kind: input, shape index: {}]
  %s6 = inlined_call_operand.vmem [shape: bf16[16,8], index: 6, kind: input, shape index: {}]
  %s7 = inlined_call_operand.vmem [shape: bf16[16,8], index: 7, kind: input, shape index: {}]
  %s8 = inlined_call_operand.vmem [shape: bf16[32,8], index: 8, kind: input, shape index: {}]
  %s9 = inlined_call_operand.vmem [shape: bf16[32,16], index: 9, kind: input, shape index: {}]
  %s10 = inlined_call_operand.vmem [shape: bf16[16,8], index: 10, kind: input, shape index: {}]
  %s11 = inlined_call_operand.hbm [shape: f32[1,16,128], index: 11, kind: output, shape index: {}]
  %s12 = sld [smem:[#allocation0]]
  $region54: #{tpu_custom_call.1} parent=0
    _
  %s14 = ssub.s32 1, %s12
  %s15 = scalar_select 0, %s14, %s12
  $region1: #{tpu_custom_call.1} parent=0
    #allocation2 [shape = 'u8[8192]{0}', space=vmem, size = 0x2000, scoped, tag = 'output window, operand 0, single buffered']
    #allocation3 [shape = 's32[1]{0}', space=sflag, size = 0x4, scoped, tag = 'scoped memory for tpu_custom_call.1']
    %16 = vsyncpa [#allocation3], 0
    // Predicated region
    $region2: #{tpu_custom_call.1} parent=1 // pred_check
      _
    $region3: #{tpu_custom_call.1} parent=1 // pred_check_branch
      %18 = sbr.rel (0) target = $region5
    $region4: #{tpu_custom_call.1} parent=1 // pred_region
      _
    $region5: #{tpu_custom_call.1} parent=1 // pred_fallthru
      _
    // Predicated region
    $region6: #{tpu_custom_call.1} parent=1 // pred_check
      _
    $region7: #{tpu_custom_call.1} parent=1 // pred_check_branch
      %20 = sbr.rel (0) target = $region9
    $region8: #{tpu_custom_call.1} parent=1 // pred_region
      _
    $region9: #{tpu_custom_call.1} parent=1 // pred_fallthru
      _
    // Predicated region
    $region10: #{tpu_custom_call.1} parent=1 // pred_check
      _
    $region11: #{tpu_custom_call.1} parent=1 // pred_check_branch
      %22 = sbr.rel (0) target = $region13
    $region12: #{tpu_custom_call.1} parent=1 // pred_region
      _
    $region13: #{tpu_custom_call.1} parent=1 // pred_fallthru
      _
    // Predicated region
    $region14: #{tpu_custom_call.1} parent=1 // pred_check
      _
    $region15: #{tpu_custom_call.1} parent=1 // pred_check_branch
      %24 = sbr.rel (0) target = $region17
    $region16: #{tpu_custom_call.1} parent=1 // pred_region
      _
    $region17: #{tpu_custom_call.1} parent=1 // pred_fallthru
      _
    // Predicated region
    $region18: #{tpu_custom_call.1} parent=1 // pred_check
      _
    $region19: #{tpu_custom_call.1} parent=1 // pred_check_branch
      %26 = sbr.rel (0) target = $region21
    $region20: #{tpu_custom_call.1} parent=1 // pred_region
      _
    $region21: #{tpu_custom_call.1} parent=1 // pred_fallthru
      _
    // Predicated region
    $region22: #{tpu_custom_call.1} parent=1 // pred_check
      _
    $region23: #{tpu_custom_call.1} parent=1 // pred_check_branch
      %28 = sbr.rel (0) target = $region25
    $region24: #{tpu_custom_call.1} parent=1 // pred_region
      _
    $region25: #{tpu_custom_call.1} parent=1 // pred_fallthru
      _
    // Predicated region
    $region26: #{tpu_custom_call.1} parent=1 // pred_check
      _
    $region27: #{tpu_custom_call.1} parent=1 // pred_check_branch
      %30 = sbr.rel (0) target = $region29
    $region28: #{tpu_custom_call.1} parent=1 // pred_region
      _
    $region29: #{tpu_custom_call.1} parent=1 // pred_fallthru
      _
    // Predicated region
    $region30: #{tpu_custom_call.1} parent=1 // pred_check
      _
    $region31: #{tpu_custom_call.1} parent=1 // pred_check_branch
      %32 = sbr.rel (0) target = $region33
    $region32: #{tpu_custom_call.1} parent=1 // pred_region
      _
    $region33: #{tpu_custom_call.1} parent=1 // pred_fallthru
      _
    // Predicated region
    $region34: #{tpu_custom_call.1} parent=1 // pred_check
      _
    $region35: #{tpu_custom_call.1} parent=1 // pred_check_branch
      %34 = sbr.rel (0) target = $region37
    $region36: #{tpu_custom_call.1} parent=1 // pred_region
      _
    $region37: #{tpu_custom_call.1} parent=1 // pred_fallthru
      _
    // Predicated region
    $region38: #{tpu_custom_call.1} parent=1 // pred_check
      _
    $region39: #{tpu_custom_call.1} parent=1 // pred_check_branch
      %36 = sbr.rel (0) target = $region41
    $region40: #{tpu_custom_call.1} parent=1 // pred_region
      _
    $region41: #{tpu_custom_call.1} parent=1 // pred_fallthru
      _
    // Predicated region
    $region42: #{tpu_custom_call.1} parent=1 // pred_check
      _
    $region43: #{tpu_custom_call.1} parent=1 // pred_check_branch
      %38 = sbr.rel (0) target = $region45
    $region44: #{tpu_custom_call.1} parent=1 // pred_region
      _
    $region45: #{tpu_custom_call.1} parent=1 // pred_fallthru
      _
    %v40 = vld [vmem:[%s1] sm:$0x1]
    %v41 = vld [vmem:[%s0] sm:$0xf]
    %v42 = vpack.c.bf16 %v41, %v41
    %v43 = vld [vmem:[%s3] sm:$0xf]
    %v44 = vld [vmem:[%s3 + $0x4] sm:$0xf]
    %v47 = vunpack.c.l.b16 %v43
    %v48 = vunpack.c.l.b16 %v44
    %v49 = vpack.c.b16 %v48, %v47
    %vm50 = vcmask 31744
    %v52 = vsel %vm50, %v49, 0
    %vm54 = vcmask 1041408
    %v56 = vsel %vm54, %v42, 0
    %58 = vmatpush.bf16.msra.mxu0 0
    %59 = vmatpush.bf16.msra.mxu0 0
    %60 = vmatpush.bf16.msra.mxu0 0
    %61 = vmatpush.bf16.msra.mxu0 0
    %62 = vmatpush.bf16.msra.mxu0 0
    %63 = vmatpush.bf16.msra.mxu0 0
    %64 = vmatpush.bf16.msra.mxu0 0
    %65 = vmatpush.bf16.msra.mxu0 %v56
    %66 = vmatmul.bf16.gmra.mxu0 %v52
    %v67 = vpop.f32.mrf.mxu0
    %v68 = vadd.f32 0.0, %v67
    %v69 = vpop.f32.mrf.mxu0
    %v70 = vadd.f32 0.0, %v69
    %71 = vdwg.mxu0
    %72 = vrot.lane.b32.xlu0 %v68, 1
    %v73 = vpop.permute.xlu0 %72
    %vm74 = vcmp.ge.s32.totalorder %v40, 1
    %v75 = vsel %vm74, 1, 0
    %v76 = vperm.slane %v75, 0
    %vm77 = vcmp.eq.s32.totalorder %v76, 1
    %v78 = vsel %vm77, %v73, 0.0
    %v79 = vadd.f32 %v70, %v78
    %v80 = vld [vmem:[%s2] sm:$0xff]
    %82 = vset.pattern.permute.xlu0 0
    %83 = vperm.xlu0 %82, %v80
    %v84 = vpop.permute.xlu0 %83
    %v86 = vadd.f32 %v79, %v84
    %v87 = vmax.f32 %v86, 0.0
    %v88 = vpack.c.bf16 %v87, %v87
    %v89 = vld [vmem:[%s4] sm:$0xf]
    %v90 = vld [vmem:[%s4 + $0x4] sm:$0xf]
    %v93 = vunpack.c.l.b16 %v89
    %v94 = vunpack.c.l.b16 %v90
    %v95 = vpack.c.b16 %v94, %v93
    %vm96 = vcmask 64512
    %v98 = vsel %vm96, %v95, 0
    %vm100 = vcmask 1043456
    %v102 = vsel %vm100, %v88, 0
    %104 = vmatpush.bf16.msra.mxu0 0
    %105 = vmatpush.bf16.msra.mxu0 0
    %106 = vmatpush.bf16.msra.mxu0 0
    %107 = vmatpush.bf16.msra.mxu0 0
    %108 = vmatpush.bf16.msra.mxu0 0
    %109 = vmatpush.bf16.msra.mxu0 0
    %110 = vmatpush.bf16.msra.mxu0 0
    %111 = vmatpush.bf16.msra.mxu0 %v102
    %112 = vmatmul.bf16.gmra.mxu0 %v98
    %v113 = vpop.f32.mrf.mxu0
    %v114 = vadd.f32 0.0, %v113
    %v115 = vpop.f32.mrf.mxu0
    %v116 = vadd.f32 0.0, %v115
    %117 = vdwg.mxu0
    %118 = vrot.lane.b32.xlu0 %v114, 1
    %v119 = vpop.permute.xlu0 %118
    %v120 = vsel %vm77, %v119, 0.0
    %v121 = vadd.f32 %v116, %v120
    %v122 = vld [vmem:[%s2 + $0x8] sm:$0xff]
    %124 = vset.pattern.permute.xlu0 0
    %125 = vperm.xlu0 %124, %v122
    %v126 = vpop.permute.xlu0 %125
    %v128 = vadd.f32 %v121, %v126
    %v129 = vmax.f32 %v128, 0.0
    %v130 = vld [vmem:[%s5] sm:$0xf]
    %v131 = vld [vmem:[%s2 + $0x10] sm:$0xff]
    %133 = vset.pattern.permute.xlu0 0
    %134 = vperm.xlu0 %133, %v131
    %v135 = vpop.permute.xlu0 %134
    %v138 = vsel %vm50, %v130, 0
    %140 = vmatpush.bf16.msra.mxu0 0
    %141 = vmatpush.bf16.msra.mxu0 0
    %142 = vmatpush.bf16.msra.mxu0 0
    %143 = vmatpush.bf16.msra.mxu0 0
    %144 = vmatpush.bf16.msra.mxu0 0
    %145 = vmatpush.bf16.msra.mxu0 0
    %146 = vmatpush.bf16.msra.mxu0 0
    %147 = vmatpush.bf16.msra.mxu0 %v56
    %148 = vmatmul.bf16.gmra.mxu0 %v138
    %v149 = vpop.f32.mrf.mxu0
    %v150 = vadd.f32 %v135, %v149
    %v151 = vpop.f32.mrf.mxu0
    %152 = vdwg.mxu0
    %v153 = vadd.f32 %v129, %v150
    %v154 = vmax.f32 %v153, 0.0
    %v155 = vpack.c.bf16 %v154, %v154
    %v156 = vld [vmem:[%s6] sm:$0xf]
    %v157 = vld [vmem:[%s6 + $0x4] sm:$0xf]
    %v160 = vunpack.c.l.b16 %v156
    %v161 = vunpack.c.l.b16 %v157
    %v162 = vpack.c.b16 %v161, %v160
    %v164 = vsel %vm96, %v162, 0
    %v167 = vsel %vm100, %v155, 0
    %169 = vmatpush.bf16.msra.mxu0 0
    %170 = vmatpush.bf16.msra.mxu0 0
    %171 = vmatpush.bf16.msra.mxu0 0
    %172 = vmatpush.bf16.msra.mxu0 0
    %173 = vmatpush.bf16.msra.mxu0 0
    %174 = vmatpush.bf16.msra.mxu0 0
    %175 = vmatpush.bf16.msra.mxu0 0
    %176 = vmatpush.bf16.msra.mxu0 %v167
    %177 = vmatmul.bf16.gmra.mxu0 %v164
    %v178 = vpop.f32.mrf.mxu0
    %v179 = vadd.f32 0.0, %v178
    %v180 = vpop.f32.mrf.mxu0
    %v181 = vadd.f32 0.0, %v180
    %182 = vdwg.mxu0
    %183 = vrot.lane.b32.xlu0 %v179, 2
    %v184 = vpop.permute.xlu0 %183
    %vm185 = vcmp.ge.s32.totalorder %v40, 2
    %v186 = vsel %vm185, 1, 0
    %v187 = vperm.slane %v186, 0
    %vm188 = vcmp.eq.s32.totalorder %v187, 1
    %v189 = vsel %vm188, %v184, 0.0
    %v190 = vadd.f32 %v181, %v189
    %v191 = vld [vmem:[%s2 + $0x18] sm:$0xff]
    %193 = vset.pattern.permute.xlu0 0
    %194 = vperm.xlu0 %193, %v191
    %v195 = vpop.permute.xlu0 %194
    %v197 = vadd.f32 %v190, %v195
    %v198 = vmax.f32 %v197, 0.0
    %v199 = vpack.c.bf16 %v198, %v198
    %v200 = vld [vmem:[%s7] sm:$0xf]
    %v201 = vld [vmem:[%s7 + $0x4] sm:$0xf]
    %v204 = vunpack.c.l.b16 %v200
    %v205 = vunpack.c.l.b16 %v201
    %v206 = vpack.c.b16 %v205, %v204
    %v208 = vsel %vm96, %v206, 0
    %v211 = vsel %vm100, %v199, 0
    %213 = vmatpush.bf16.msra.mxu0 0
    %214 = vmatpush.bf16.msra.mxu0 0
    %215 = vmatpush.bf16.msra.mxu0 0
    %216 = vmatpush.bf16.msra.mxu0 0
    %217 = vmatpush.bf16.msra.mxu0 0
    %218 = vmatpush.bf16.msra.mxu0 0
    %219 = vmatpush.bf16.msra.mxu0 0
    %220 = vmatpush.bf16.msra.mxu0 %v211
    %221 = vmatmul.bf16.gmra.mxu0 %v208
    %v222 = vpop.f32.mrf.mxu0
    %v223 = vadd.f32 0.0, %v222
    %v224 = vpop.f32.mrf.mxu0
    %v225 = vadd.f32 0.0, %v224
    %226 = vdwg.mxu0
    %227 = vrot.lane.b32.xlu0 %v223, 2
    %v228 = vpop.permute.xlu0 %227
    %v229 = vsel %vm188, %v228, 0.0
    %v230 = vadd.f32 %v225, %v229
    %v231 = vld [vmem:[%s2 + $0x20] sm:$0xff]
    %233 = vset.pattern.permute.xlu0 0
    %234 = vperm.xlu0 %233, %v231
    %v235 = vpop.permute.xlu0 %234
    %v237 = vadd.f32 %v230, %v235
    %v238 = vmax.f32 %v237, 0.0
    %v239 = vunpack.c.l.bf16 %v155
    %v240 = vadd.f32 %v238, %v239
    %v241 = vmax.f32 %v240, 0.0
    %v242 = vpack.c.bf16 %v241, %v241
    %v243 = vld [vmem:[%s8] sm:$0xf]
    %v244 = vld [vmem:[%s8 + $0x4] sm:$0xf]
    %v245 = vld [vmem:[%s8 + $0x8] sm:$0xf]
    %v246 = vld [vmem:[%s8 + $0xc] sm:$0xf]
    %v251 = vunpack.c.l.b16 %v243
    %v252 = vunpack.c.l.b16 %v244
    %v253 = vunpack.c.l.b16 %v245
    %v254 = vunpack.c.l.b16 %v246
    %v255 = vpack.c.b16 %v252, %v251
    %v256 = vpack.c.b16 %v254, %v253
    %v258 = vsel %vm96, %v255, 0
    %v261 = vsel %vm96, %v256, 0
    %v264 = vsel %vm100, %v242, 0
    %266 = vmatpush.bf16.msra.mxu0 0
    %267 = vmatpush.bf16.msra.mxu0 0
    %268 = vmatpush.bf16.msra.mxu0 0
    %269 = vmatpush.bf16.msra.mxu0 0
    %270 = vmatpush.bf16.msra.mxu0 0
    %271 = vmatpush.bf16.msra.mxu0 0
    %272 = vmatpush.bf16.msra.mxu0 0
    %273 = vmatpush.bf16.msra.mxu0 %v264
    %274 = vmatmul.bf16.gmra.mxu0 %v258
    %v275 = vpop.f32.mrf.mxu0
    %v276 = vadd.f32 0.0, %v275
    %v277 = vpop.f32.mrf.mxu0
    %v278 = vadd.f32 0.0, %v277
    %279 = vmatmul.bf16.gmra.mxu0 %v261
    %v280 = vpop.f32.mrf.mxu0
    %v281 = vadd.f32 0.0, %v280
    %v282 = vpop.f32.mrf.mxu0
    %v283 = vadd.f32 0.0, %v282
    %284 = vdwg.mxu0
    %285 = vrot.lane.b32.xlu0 %v276, 4
    %v286 = vpop.permute.xlu0 %285
    %287 = vrot.lane.b32.xlu0 %v278, 4
    %v288 = vpop.permute.xlu0 %287
    %vm289 = vcmp.ge.s32.totalorder %v40, 4
    %v290 = vsel %vm289, 1, 0
    %v291 = vperm.slane %v290, 0
    %vm292 = vcmp.eq.s32.totalorder %v291, 1
    %v293 = vsel %vm292, %v286, 0.0
    %v294 = vsel %vm292, %v288, 0.0
    %v295 = vadd.f32 %v281, %v293
    %v296 = vadd.f32 %v283, %v294
    %v297 = vld [vmem:[%s2 + $0x28] sm:$0xff]
    %v298 = vld [vmem:[%s2 + $0x30] sm:$0xff]
    %300 = vset.pattern.permute.xlu0 0
    %301 = vperm.xlu0 %300, %v297
    %v302 = vpop.permute.xlu0 %301
    %305 = vset.pattern.permute.xlu0 0
    %306 = vperm.xlu0 %305, %v298
    %v307 = vpop.permute.xlu0 %306
    %v309 = vadd.f32 %v295, %v302
    %v310 = vadd.f32 %v296, %v307
    %v311 = vmax.f32 %v309, 0.0
    %v312 = vmax.f32 %v310, 0.0
    %v313 = vpack.c.bf16 %v312, %v311
    %v314 = vld [vmem:[%s9] sm:$0xf]
    %v315 = vld [vmem:[%s9 + $0x4] sm:$0xf]
    %v316 = vld [vmem:[%s9 + $0x8] sm:$0xf]
    %v317 = vld [vmem:[%s9 + $0xc] sm:$0xf]
    %v322 = vunpack.c.l.b16 %v314
    %v323 = vunpack.c.l.b16 %v315
    %v324 = vunpack.c.l.b16 %v316
    %v325 = vunpack.c.l.b16 %v317
    %v326 = vpack.c.b16 %v323, %v322
    %v327 = vpack.c.b16 %v325, %v324
    %vm328 = vcmask 130048
    %v330 = vsel %vm328, %v326, 0
    %v333 = vsel %vm328, %v327, 0
    %335 = vmatpush.bf16.msra.mxu0 0
    %336 = vmatpush.bf16.msra.mxu0 0
    %337 = vmatpush.bf16.msra.mxu0 0
    %338 = vmatpush.bf16.msra.mxu0 0
    %339 = vmatpush.bf16.msra.mxu0 0
    %340 = vmatpush.bf16.msra.mxu0 0
    %341 = vmatpush.bf16.msra.mxu0 0
    %342 = vmatpush.bf16.msra.mxu0 %v313
    %343 = vmatmul.bf16.gmra.mxu0 %v330
    %v344 = vpop.f32.mrf.mxu0
    %v345 = vadd.f32 0.0, %v344
    %v346 = vpop.f32.mrf.mxu0
    %v347 = vadd.f32 0.0, %v346
    %348 = vmatmul.bf16.gmra.mxu0 %v333
    %v349 = vpop.f32.mrf.mxu0
    %v350 = vadd.f32 0.0, %v349
    %v351 = vpop.f32.mrf.mxu0
    %v352 = vadd.f32 0.0, %v351
    %353 = vdwg.mxu0
    %354 = vrot.lane.b32.xlu0 %v345, 4
    %v355 = vpop.permute.xlu0 %354
    %356 = vrot.lane.b32.xlu0 %v347, 4
    %v357 = vpop.permute.xlu0 %356
    %v358 = vsel %vm292, %v355, 0.0
    %v359 = vsel %vm292, %v357, 0.0
    %v360 = vadd.f32 %v350, %v358
    %v361 = vadd.f32 %v352, %v359
    %v362 = vld [vmem:[%s2 + $0x38] sm:$0xff]
    %v363 = vld [vmem:[%s2 + $0x40] sm:$0xff]
    %365 = vset.pattern.permute.xlu0 0
    %366 = vperm.xlu0 %365, %v362
    %v367 = vpop.permute.xlu0 %366
    %370 = vset.pattern.permute.xlu0 0
    %371 = vperm.xlu0 %370, %v363
    %v372 = vpop.permute.xlu0 %371
    %v374 = vadd.f32 %v360, %v367
    %v375 = vadd.f32 %v361, %v372
    %v376 = vmax.f32 %v374, 0.0
    %v377 = vmax.f32 %v375, 0.0
    %v378 = vld [vmem:[%s10] sm:$0xf]
    %v379 = vld [vmem:[%s10 + $0x4] sm:$0xf]
    %v380 = vld [vmem:[%s2 + $0x48] sm:$0xff]
    %v381 = vld [vmem:[%s2 + $0x50] sm:$0xff]
    %383 = vset.pattern.permute.xlu0 0
    %384 = vperm.xlu0 %383, %v380
    %v385 = vpop.permute.xlu0 %384
    %388 = vset.pattern.permute.xlu0 0
    %389 = vperm.xlu0 %388, %v381
    %v390 = vpop.permute.xlu0 %389
    %v394 = vunpack.c.l.b16 %v378
    %v395 = vunpack.c.l.b16 %v379
    %v396 = vpack.c.b16 %v395, %v394
    %v398 = vsel %vm96, %v396, 0
    %400 = vmatpush.bf16.msra.mxu0 0
    %401 = vmatpush.bf16.msra.mxu0 0
    %402 = vmatpush.bf16.msra.mxu0 0
    %403 = vmatpush.bf16.msra.mxu0 0
    %404 = vmatpush.bf16.msra.mxu0 0
    %405 = vmatpush.bf16.msra.mxu0 0
    %406 = vmatpush.bf16.msra.mxu0 0
    %407 = vmatpush.bf16.msra.mxu0 %v264
    %408 = vmatmul.bf16.gmra.mxu0 %v398
    %v409 = vpop.f32.mrf.mxu0
    %v410 = vadd.f32 %v385, %v409
    %v411 = vpop.f32.mrf.mxu0
    %v412 = vadd.f32 %v390, %v411
    %413 = vdwg.mxu0
    %v414 = vadd.f32 %v376, %v410
    %v415 = vadd.f32 %v377, %v412
    %v416 = vmax.f32 %v414, 0.0
    %v417 = vmax.f32 %v415, 0.0
    %418 = vst [vmem:[#allocation2] sm:$0xff] %v416
    %419 = vst [vmem:[#allocation2 + $0x8] sm:$0xff] %v417
    // Predicated region
    $region46: #{tpu_custom_call.1} parent=1 // pred_check
      _
    $region47: #{tpu_custom_call.1} parent=1 // pred_check_branch
      %421 = sbr.rel (0) target = $region49
    $region48: #{tpu_custom_call.1} parent=1 // pred_region
      %423 = vsyncadd [#allocation3], 0
      %s424 = sshll.u32 [#allocation2], 4
      %s425 = int_to_ptr.vmem [resolvable:$true] %s424
      %s426 = sshll.u32 %s11, 4
      %s427 = int_to_ptr.hbm [resolvable:$true] %s426
      %432 = dma.vmem_to_hbm [thread:$0]  %s425, 256, %s427, [#allocation3], 128, 128, 8
    $region49: #{tpu_custom_call.1} parent=1 // pred_fallthru
      _
    // Predicated region
    $region50: #{tpu_custom_call.1} parent=1 // pred_check
      _
    $region51: #{tpu_custom_call.1} parent=1 // pred_check_branch
      %434 = sbr.rel (0) target = $region53
    $region52: #{tpu_custom_call.1} parent=1 // pred_region
      %436 = dma.done [#allocation3], 256
    $region53: #{tpu_custom_call.1} parent=1 // pred_fallthru
      _
    %437 = vsyncpa [#allocation3], 1

</llo_original>
